<compile_context>
chip_gen: v7x
topology: tpu7x:2x2x1
jax: 0.10.0
libtpu: 0.0.40
codegen_flags: <defaults>
</compile_context>

<pallas_src>
import functools

import jax
import jax.numpy as jnp
import numpy as np
from jax.experimental import pallas as pl
from jax.experimental.pallas import tpu as pltpu

LANE = 128
COMPUTE_DTYPE = jnp.bfloat16


def _round_up(x, m):
    return (x + m - 1) // m * m


def _choose_tn(N, max_tn=512):
    """Pick an N-tile size: full N when small (or when N is not sublane-aligned),
    otherwise a divisor of N that is a multiple of 8 and <= max_tn."""
    if N <= max_tn or N % 8 != 0:
        return N
    for tn in range(max_tn, 7, -8):
        if N % tn == 0:
            return tn
    return N


def embeddings_kernel(patches_ref, w_ref, posb_ref, out_ref):
    # patches_ref: (1, TN, K)  bf16 -- one image's patch rows for this N tile
    # w_ref:       (K, Hp)     bf16 -- patch-embedding weight (VMEM resident, constant index_map)
    # posb_ref:    (TN, Hp)    f32  -- position embeddings with conv bias pre-folded
    # out_ref:     (1, TN, Hp)
    p = patches_ref[0]                                                   # (TN, K)
    y = jnp.dot(p, w_ref[...], preferred_element_type=jnp.float32)      # MXU, f32 accumulation
    y = y + posb_ref[...]                                               # fused (bias + pos) add
    out_ref[0] = y.astype(out_ref.dtype)


def prepare_embedding_params(conv_w, conv_b, pos_emb, compute_dtype=COMPUTE_DTYPE):
    """One-time parameter prep (NOT per forward call):
       conv_w (hidden, C, P, P), conv_b (hidden,), pos_emb (1, N, hidden)
       -> w_kh (K, Hp) compute_dtype, posb (N, Hp) f32, where Hp = hidden rounded up to 128 lanes."""
    hidden, C, P, _ = conv_w.shape
    K = C * P * P
    Hp = _round_up(hidden, LANE)
    w_kh = jnp.transpose(conv_w.reshape(hidden, K)).astype(compute_dtype)            # (K, hidden)
    posb = pos_emb[0].astype(jnp.float32) + conv_b.astype(jnp.float32)[None, :]      # fold conv bias
    if Hp != hidden:                                                                  # lane padding
        w_kh = jnp.pad(w_kh, ((0, 0), (0, Hp - hidden)))
        posb = jnp.pad(posb, ((0, 0), (0, Hp - hidden)))
    return w_kh, posb


@functools.partial(jax.jit, static_argnames=("patch_size", "hidden"))
def embeddings_forward(x, w_kh, posb, *, patch_size, hidden):
    """x: (B, C, H, W); w_kh: (K, Hp) prepared weight; posb: (N, Hp) prepared pos+bias.
    Returns (embeddings (B, N, hidden), features=None)."""
    B, C, Hi, Wi = x.shape
    P = patch_size
    gh, gw = Hi // P, Wi // P
    N = gh * gw
    K = C * P * P
    Hp = w_kh.shape[1]
    assert w_kh.shape[0] == K
    # TODO(synk): position-embedding bilinear interpolation (n_patches mismatch branch) not implemented.
    assert posb.shape[0] == N, "pos-embed interpolation path not implemented"

    # im2col: a non-overlapping stride-P conv is a plain matmul over K = C*P*P. The reshape/transpose/
    # cast lives in the wrapper but is allowed to fuse into the pallas call (allow_input_fusion) so XLA
    # does not have to materialize the (B, N, K) patch tensor in HBM; bf16 halves streamed bytes anyway.
    patches = (x.astype(w_kh.dtype)
                 .reshape(B, C, gh, P, gw, P)
                 .transpose(0, 2, 4, 1, 3, 5)        # (B, gh, gw, C, P, P)
                 .reshape(B, N, K))                  # K ordered (c, pi, pj), matching the weight reshape

    TN = _choose_tn(N)
    n_tiles = N // TN

    # VMEM budget: double-buffered streamed blocks + resident weight, with generous headroom.
    c_bytes = jnp.dtype(w_kh.dtype).itemsize
    o_bytes = jnp.dtype(x.dtype).itemsize
    block_bytes = (TN * K * c_bytes        # patches block
                   + K * Hp * c_bytes      # weight (resident)
                   + TN * Hp * 4           # pos+bias block
                   + TN * Hp * o_bytes)    # output block
    vmem_limit = int(min(max(4 * block_bytes + (4 << 20), 32 << 20), 64 << 20))

    out = pl.pallas_call(
        embeddings_kernel,
        out_shape=jax.ShapeDtypeStruct((B, N, Hp), x.dtype),
        grid_spec=pltpu.PrefetchScalarGridSpec(
            num_scalar_prefetch=0,
            grid=(B, n_tiles),
            in_specs=[
                pl.BlockSpec((1, TN, K), lambda b, j: (b, j, 0)),    # streamed patch rows
                pl.BlockSpec((K, Hp), lambda b, j: (0, 0)),          # weight, VMEM resident
                pl.BlockSpec((TN, Hp), lambda b, j: (j, 0)),         # pos+bias for this N tile
            ],
            out_specs=pl.BlockSpec((1, TN, Hp), lambda b, j: (b, j, 0)),
        ),
        compiler_params=pltpu.CompilerParams(
            dimension_semantics=("parallel", "parallel"),   # megacore over batch and N tiles
            vmem_limit_bytes=vmem_limit,
            allow_input_fusion=[True, False, False],        # fuse the im2col producer into the call
        ),
    )(patches, w_kh, posb)

    if Hp != hidden:
        out = out[:, :, :hidden]   # drop lane padding (no-op for standard ViT hidden sizes)

    features = None  # TODO(synk): hybrid ResNetV2 backbone path not translated.
    # TODO(synk): training-mode dropout not implemented (eval: identity).
    return out, features


def reference_forward(x, conv_w, conv_b, pos_emb, patch_size, compute_dtype=COMPUTE_DTYPE):
    # Pure-JAX reference mirroring PyTorch Embeddings.forward (eval, non-hybrid), using the same
    # bf16 operand rounding / f32 accumulation as the kernel so the comparison is apples-to-apples.
    B = x.shape[0]
    hidden = conv_w.shape[0]
    y = jax.lax.conv_general_dilated(
        x.astype(compute_dtype), conv_w.astype(compute_dtype),
        window_strides=(patch_size, patch_size), padding="VALID",
        dimension_numbers=("NCHW", "OIHW", "NCHW"),
        preferred_element_type=jnp.float32)
    y = y + conv_b.reshape(1, hidden, 1, 1).astype(jnp.float32)
    y = y.reshape(B, hidden, -1).transpose(0, 2, 1)            # flatten(2).transpose(-1, -2)
    return (y + pos_emb.astype(jnp.float32)).astype(x.dtype), None


if __name__ == "__main__":
    B, C, IMG, P, HIDDEN = 2, 3, 16, 4, 32                     # small shapes consistent with the module
    N = (IMG // P) * (IMG // P)                                # n_patches = 16

    key = jax.random.PRNGKey(0)
    kx, kw, kb, kp = jax.random.split(key, 4)
    x = jax.random.normal(kx, (B, C, IMG, IMG), jnp.float32)
    conv_w = jax.random.normal(kw, (HIDDEN, C, P, P), jnp.float32) * 0.02
    conv_b = jax.random.normal(kb, (HIDDEN,), jnp.float32) * 0.02
    pos_emb = jax.random.normal(kp, (1, N, HIDDEN), jnp.float32) * 0.02

    w_kh, posb = prepare_embedding_params(conv_w, conv_b, pos_emb)     # one-time param prep
    emb, feats = embeddings_forward(x, w_kh, posb, patch_size=P, hidden=HIDDEN)
    jax.block_until_ready(emb)

    emb_ref, _ = reference_forward(x, conv_w, conv_b, pos_emb, P)
    np.testing.assert_allclose(np.asarray(emb), np.asarray(emb_ref), atol=1e-3, rtol=1e-3)
    assert emb.shape == (B, N, HIDDEN)
    assert feats is None

    print("KERNEL_OK")
</pallas_src>

<mosaic_0001>
module attributes {stable_mosaic.version = 11 : i64} {
  func.func @embeddings_kernel(%arg0: i32, %arg1: i32, %arg2: memref<1x16x48xbf16, #tpu.memory_space<vmem>>, %arg3: memref<48x128xbf16, #tpu.memory_space<vmem>>, %arg4: memref<16x128xf32, #tpu.memory_space<vmem>>, %arg5: memref<1x16x128xf32, #tpu.memory_space<vmem>>) attributes {dimension_semantics = [#tpu.dimension_semantics<parallel>, #tpu.dimension_semantics<parallel>], iteration_bounds = array<i64: 2, 1>, scalar_prefetch = 0 : i64, scratch_operands = 0 : i64, tpu.core_type = #tpu.core_type<tc>, window_params = [{transform_indices = @transform_0, window_bounds = array<i64: 1, 16, 48>}, {pipeline_mode = #tpu.pipeline_mode<synchronous>, transform_indices = @transform_1, window_bounds = array<i64: 48, 128>}, {transform_indices = @transform_2, window_bounds = array<i64: 16, 128>}, {transform_indices = @transform_3, window_bounds = array<i64: 1, 16, 128>}]} {
    %c0 = arith.constant 0 : index
    %c0_0 = arith.constant 0 : index
    %c0_1 = arith.constant 0 : index
    %0 = vector.load %arg2[%c0, %c0_0, %c0_1] : memref<1x16x48xbf16, #tpu.memory_space<vmem>>, vector<1x16x48xbf16>
    %1 = vector.shape_cast %0 : vector<1x16x48xbf16> to vector<16x48xbf16>
    %c0_2 = arith.constant 0 : index
    %c0_3 = arith.constant 0 : index
    %2 = vector.load %arg3[%c0_2, %c0_3] : memref<48x128xbf16, #tpu.memory_space<vmem>>, vector<48x128xbf16>
    %cst = arith.constant dense<0.000000e+00> : vector<16x128xf32>
    %3 = tpu.matmul %1, %2, %cst {dimension_numbers = #tpu.dot_dimension_numbers<[1], [0], [0], [1], [0, 0, 1, 1], [], []>} : vector<16x48xbf16>, vector<48x128xbf16>, vector<16x128xf32> -> vector<16x128xf32>
    %c0_4 = arith.constant 0 : index
    %c0_5 = arith.constant 0 : index
    %4 = vector.load %arg4[%c0_4, %c0_5] : memref<16x128xf32, #tpu.memory_space<vmem>>, vector<16x128xf32>
    %5 = arith.addf %3, %4 : vector<16x128xf32>
    %c0_6 = arith.constant 0 : index
    %c0_7 = arith.constant 0 : index
    %c0_8 = arith.constant 0 : index
    %6 = vector.load %arg5[%c0_6, %c0_7, %c0_8] : memref<1x16x128xf32, #tpu.memory_space<vmem>>, vector<1x16x128xf32>
    %7 = vector.shape_cast %6 : vector<1x16x128xf32> to vector<16x128xf32>
    %8 = vector.shape_cast %5 : vector<16x128xf32> to vector<1x16x128xf32>
    tpu.vector_store %arg5[%c0_6, %c0_7, %c0_8], %8 {strides = array<i32>} : memref<1x16x128xf32, #tpu.memory_space<vmem>>, vector<1x16x128xf32>,
    return
  }
  func.func @transform_0(%arg0: i32, %arg1: i32) -> (i32, i32, i32) {
    %c0_i32 = arith.constant 0 : i32
    %c0_i32_0 = arith.constant 0 : i32
    return %arg0, %arg1, %c0_i32 : i32, i32, i32
  }
  func.func @transform_1(%arg0: i32, %arg1: i32) -> (i32, i32) {
    %c0_i32 = arith.constant 0 : i32
    %c0_i32_0 = arith.constant 0 : i32
    %c0_i32_1 = arith.constant 0 : i32
    return %c0_i32, %c0_i32_0 : i32, i32
  }
  func.func @transform_2(%arg0: i32, %arg1: i32) -> (i32, i32) {
    %c0_i32 = arith.constant 0 : i32
    %c0_i32_0 = arith.constant 0 : i32
    return %arg1, %c0_i32 : i32, i32
  }
  func.func @transform_3(%arg0: i32, %arg1: i32) -> (i32, i32, i32) {
    %c0_i32 = arith.constant 0 : i32
    %c0_i32_0 = arith.constant 0 : i32
    return %arg0, %arg1, %c0_i32 : i32, i32, i32
  }
}

</mosaic_0001>

<llo_original>
// kernel: embeddings_forward.1
$region0: #{embeddings_forward.1}
  #allocation0 [shape = 'u32[]', space=smem, size = 0x4, offset = 0x4, fixed_abs, tag = 'smem constant byte address 0x4 - core index']
  #allocation1 [shape = 'u32[144,128]{1,0:T(1,128)}', space=vmem, size = 0x12000, scoped, tag = 'internal scratch']
  %s0 = inlined_call_operand.vmem [shape: bf16[2,16,48], index: 0, kind: input, shape index: {}]
  %s1 = inlined_call_operand.vmem [shape: bf16[48,128], index: 1, kind: input, shape index: {}]
  %s2 = inlined_call_operand.vmem [shape: f32[16,128], index: 2, kind: input, shape index: {}]
  %s3 = inlined_call_operand.hbm [shape: f32[2,16,128], index: 3, kind: output, shape index: {}]
  %s4 = sld [smem:[#allocation0]]
  $region45: #{embeddings_forward.1} parent=0
    _
  %s6 = ssub.s32 1, %s4
  %s7 = scalar_select 0, %s6, %s4
  $region1: #{embeddings_forward.1} parent=0
    #allocation2 [shape = 'u8[16384]{0}', space=vmem, size = 0x4000, scoped, tag = 'output window, operand 0']
    #allocation3 [shape = 's32[2]{0}', space=sflag, size = 0x8, scoped, tag = 'scoped memory for embeddings_forward.1']
    %8 = vsyncpa [#allocation3], 0
    %s9 = scalar_lea.sflag [#allocation3], 1
    %10 = vsyncpa %s9, 0
    loop: start=0, step=1, limit=4
    $region2: #{embeddings_forward.1} parent=1 // loop_pre_header
      _
    $region3: #{embeddings_forward.1} parent=1 // loop_header
      %s12 = sphi 0, %s16
      %p13 = scmp.ge.s32.totalorder %s12, 4
      %s19 = sphi 0, %s31
      %s20 = sphi 0, %s27
      %s21 = sphi 0, %s19
      %s22 = sphi 0, %s20
      %s23 = sphi 0, %s21
      %s24 = sphi 0, %s22
      %s36 = sphi 0, %s38
      %s39 = sphi 0, %s36
      %s40 = sphi 0, %s39
      %s56 = sphi 0, %s40
      %s60 = sphi 0, %s60
      %s62 = sphi 0, %s60
      %s63 = sphi 0, %s62
      %s77 = sphi 0, %s63
      %s83 = sphi 0, %s85
      %s86 = sphi 0, %s83
      %s87 = sphi 0, %s86
      %s103 = sphi 0, %s87
      %s111 = sphi 0, %s113
      %s114 = sphi 0, %s111
      %s115 = sphi 0, %s114
      %s131 = sphi 0, %s115
    $region4: #{embeddings_forward.1} parent=1 // loop_header_branch
      %15 = sbr.rel (%p13) target = $region8
    $region5: #{embeddings_forward.1} parent=1 // loop_body
      %s17 = ssub.s32 %s12, 1
      %s18 = ssub.s32 %s12, 2
      %s25 = sadd.s32 1, %s20
      %p26 = scmp.ge.s32.totalorder %s25, 1
      %s27 = scalar_select %p26, 0, %s25
      %s28 = sadd.s32 1, %s19
      %s29 = scalar_select %p26, %s28, %s19
      %p30 = scmp.ge.s32.totalorder %s29, 2
      %s31 = scalar_select %p30, 0, %s29
      %s32 = ssub.s32 %s19, %s31
      %s33 = ssub.s32 %s20, %s27
      %s34 = sor.u32 %s32, %s33
      %p35 = scmp.eq.s32.totalorder %s34, 0
      %s37 = sadd.s32 %s36, 1
      %s38 = scalar_select %p35, %s36, %s37
      %p41 = pneg %p35
      %p42 = scmp.eq.s32.totalorder %s12, 1
      %p43 = por %p41, %p42
      %p44 = scmp.ne.s32.totalorder %s36, %s39
      %p45 = scmp.eq.s32.totalorder %s12, 0
      %p46 = por %p44, %p45
      %p47 = scmp.ne.s32.totalorder %s36, %s39
      %p48 = scmp.eq.s32.totalorder %s17, 1
      %p49 = por %p47, %p48
      %p50 = scmp.ne.s32.totalorder %s39, %s40
      %p51 = scmp.eq.s32.totalorder %s17, 0
      %p52 = por %p50, %p51
      %p53 = scmp.ne.s32.totalorder %s39, %s40
      %p54 = scmp.eq.s32.totalorder %s18, 1
      %p55 = por %p53, %p54
      %p57 = scmp.ne.s32.totalorder %s40, %s56
      %p58 = scmp.eq.s32.totalorder %s18, 0
      %p59 = por %p57, %p58
      %s61 = sadd.s32 %s60, 1
      %p64 = scmp.eq.s32.totalorder %s12, 1
      %p65 = scmp.ne.s32.totalorder %s60, %s62
      %p66 = scmp.eq.s32.totalorder %s12, 0
      %p67 = por %p65, %p66
      %p68 = scmp.ne.s32.totalorder %s60, %s62
      %p69 = scmp.eq.s32.totalorder %s17, 1
      %p70 = por %p68, %p69
      %p71 = scmp.ne.s32.totalorder %s62, %s63
      %p72 = scmp.eq.s32.totalorder %s17, 0
      %p73 = por %p71, %p72
      %p74 = scmp.ne.s32.totalorder %s62, %s63
      %p75 = scmp.eq.s32.totalorder %s18, 1
      %p76 = por %p74, %p75
      %p78 = scmp.ne.s32.totalorder %s63, %s77
      %p79 = scmp.eq.s32.totalorder %s18, 0
      %p80 = por %p78, %p79
      %s81 = ssub.s32 %s20, %s27
      %p82 = scmp.eq.s32.totalorder %s81, 0
      %s84 = sadd.s32 %s83, 1
      %s85 = scalar_select %p82, %s83, %s84
      %p88 = pneg %p82
      %p89 = scmp.eq.s32.totalorder %s12, 1
      %p90 = por %p88, %p89
      %p91 = scmp.ne.s32.totalorder %s83, %s86
      %p92 = scmp.eq.s32.totalorder %s12, 0
      %p93 = por %p91, %p92
      %p94 = scmp.ne.s32.totalorder %s83, %s86
      %p95 = scmp.eq.s32.totalorder %s17, 1
      %p96 = por %p94, %p95
      %p97 = scmp.ne.s32.totalorder %s86, %s87
      %p98 = scmp.eq.s32.totalorder %s17, 0
      %p99 = por %p97, %p98
      %p100 = scmp.ne.s32.totalorder %s86, %s87
      %p101 = scmp.eq.s32.totalorder %s18, 1
      %p102 = por %p100, %p101
      %p104 = scmp.ne.s32.totalorder %s87, %s103
      %p105 = scmp.eq.s32.totalorder %s18, 0
      %p106 = por %p104, %p105
      %s107 = ssub.s32 %s19, %s31
      %s108 = ssub.s32 %s20, %s27
      %s109 = sor.u32 %s107, %s108
      %p110 = scmp.eq.s32.totalorder %s109, 0
      %s112 = sadd.s32 %s111, 1
      %s113 = scalar_select %p110, %s111, %s112
      %p116 = pneg %p110
      %p117 = scmp.eq.s32.totalorder %s12, 1
      %p118 = por %p116, %p117
      %p119 = scmp.ne.s32.totalorder %s111, %s114
      %p120 = scmp.eq.s32.totalorder %s12, 0
      %p121 = por %p119, %p120
      %p122 = scmp.ne.s32.totalorder %s111, %s114
      %p123 = scmp.eq.s32.totalorder %s17, 1
      %p124 = por %p122, %p123
      %p125 = scmp.ne.s32.totalorder %s114, %s115
      %p126 = scmp.eq.s32.totalorder %s17, 0
      %p127 = por %p125, %p126
      %p128 = scmp.ne.s32.totalorder %s114, %s115
      %p129 = scmp.eq.s32.totalorder %s18, 1
      %p130 = por %p128, %p129
      %p132 = scmp.ne.s32.totalorder %s115, %s131
      %p133 = scmp.eq.s32.totalorder %s18, 0
      %p134 = por %p132, %p133
      %p135 = scmp.le.s32.totalorder 1, %s12
      %p136 = scmp.lt.s32.totalorder %s12, 3
      %p137 = pnand %p135, %p136
      %p138 = pneg %p137
      // Predicated region
      $region9: #{embeddings_forward.1} parent=5 // pred_check
        _
      $region10: #{embeddings_forward.1} parent=5 // pred_check_branch
        %140 = sbr.rel (%p137) target = $region12
      $region11: #{embeddings_forward.1} parent=5 // pred_region
        %s141 = ssub.s32 %s12, 1
        // Predicated region
        $region13: #{embeddings_forward.1} parent=11 // pred_check
          %p142 = pneg %p73
        $region14: #{embeddings_forward.1} parent=11 // pred_check_branch
          %144 = sbr.rel (%p142) target = $region16
        $region15: #{embeddings_forward.1} parent=11 // pred_region
          _
        $region16: #{embeddings_forward.1} parent=11 // pred_fallthru
          _
        // Predicated region
        $region17: #{embeddings_forward.1} parent=11 // pred_check
          %p145 = pneg %p99
        $region18: #{embeddings_forward.1} parent=11 // pred_check_branch
          %147 = sbr.rel (%p145) target = $region20
        $region19: #{embeddings_forward.1} parent=11 // pred_region
          %s148 = smul.u32 2, %s22
          %p149 = scmp.lt.s32.totalorder %s148, 1
          %s150 = scalar_select %p149, %s148, 1
          %s151 = smul.addr %s150, 8
          %s152 = scalar_lea.vmem %s2, %s151
          %s153 = smul.u32 2, %s22
        $region20: #{embeddings_forward.1} parent=11 // pred_fallthru
          _
      $region12: #{embeddings_forward.1} parent=5 // pred_fallthru
        _
      %p154 = scmp.lt.s32.totalorder %s12, 2
      // Predicated region
      $region21: #{embeddings_forward.1} parent=5 // pred_check
        %p155 = pneg %p154
      $region22: #{embeddings_forward.1} parent=5 // pred_check_branch
        %157 = sbr.rel (%p155) target = $region24
      $region23: #{embeddings_forward.1} parent=5 // pred_region
        // Predicated region
        $region25: #{embeddings_forward.1} parent=23 // pred_check
          %p158 = pneg %p46
        $region26: #{embeddings_forward.1} parent=23 // pred_check_branch
          %160 = sbr.rel (%p158) target = $region28
        $region27: #{embeddings_forward.1} parent=23 // pred_region
          %s161 = smul.u32 2, %s20
          %p162 = scmp.lt.s32.totalorder %s19, 1
          %s163 = scalar_select %p162, %s19, 1
          %p164 = scmp.lt.s32.totalorder %s161, 1
          %s165 = scalar_select %p164, %s161, 1
          %s166 = smul.addr %s163, 2
          %s167 = sadd.s32 %s165, %s166
          %s168 = smul.addr %s167, 4
          %s169 = scalar_lea.vmem %s0, %s168
          %s170 = smul.u32 2, %s20
        $region28: #{embeddings_forward.1} parent=23 // pred_fallthru
          _
      $region24: #{embeddings_forward.1} parent=5 // pred_fallthru
        _
      %p171 = scmp.le.s32.totalorder 1, %s12
      %p172 = scmp.lt.s32.totalorder %s12, 3
      %p173 = pnand %p171, %p172
      %p174 = pneg %p173
      // Predicated region
      $region29: #{embeddings_forward.1} parent=5 // pred_check
        _
      $region30: #{embeddings_forward.1} parent=5 // pred_check_branch
        %176 = sbr.rel (%p173) target = $region32
      $region31: #{embeddings_forward.1} parent=5 // pred_region
        %s177 = ssub.s32 %s12, 1
        %s178 = smul.u32 2, %s22
        %p179 = scmp.lt.s32.totalorder %s21, 1
        %s180 = scalar_select %p179, %s21, 1
        %p181 = scmp.lt.s32.totalorder %s178, 1
        %s182 = scalar_select %p181, %s178, 1
        %s183 = smul.addr %s180, 2
        %s184 = sadd.s32 %s182, %s183
        %s185 = smul.addr %s184, 4
        %s186 = scalar_lea.vmem %s0, %s185
        %p187 = pneg %p52
        %p188 = pneg %p49
        %p189 = pneg %p73
        %p190 = pneg %p70
        %s191 = smul.u32 2, %s22
        %p192 = scmp.lt.s32.totalorder %s191, 1
        %s193 = scalar_select %p192, %s191, 1
        %s194 = smul.addr %s193, 8
        %s195 = scalar_lea.vmem %s2, %s194
        %p196 = pneg %p99
        %p197 = pneg %p96
        %p198 = pneg %p127
        %p199 = pneg %p124
        %s200 = sand.u32 %s114, 1
        %s201 = scalar_lea.sflag [#allocation3], %s200
        %s202 = sand.u32 %s114, 1
        %s203 = smul.addr %s202, 16
        %s204 = scalar_lea.vmem [#allocation2], %s203
        %s205 = smul.u32 2, %s22
        %p206 = scmp.lt.s32.totalorder %s21, 1
        %s207 = scalar_select %p206, %s21, 1
        %p208 = scmp.lt.s32.totalorder %s205, 1
        %s209 = scalar_select %p208, %s205, 1
        %s210 = smul.addr %s207, 2
        %s211 = sadd.s32 %s209, %s210
        %s212 = smul.addr %s211, 4
        %s213 = scalar_lea.vmem %s0, %s212
        %s214 = smul.u32 2, %s22
        %s215 = smul.u32 2, %s22
        %p216 = scmp.lt.s32.totalorder %s215, 1
        %s217 = scalar_select %p216, %s215, 1
        %s218 = smul.addr %s217, 8
        %s219 = scalar_lea.vmem %s2, %s218
        %s220 = smul.u32 2, %s22
        %s221 = smul.u32 2, %s22
        %v223 = vld [vmem:[%s213] sm:$0xf]
        %v224 = vld [vmem:[%s213 + $0x4] sm:$0xf]
        %v225 = vld [vmem:[%s1] sm:$0xf]
        %v226 = vld [vmem:[%s1 + $0x4] sm:$0xf]
        %v227 = vld [vmem:[%s1 + $0x8] sm:$0xf]
        %v228 = vld [vmem:[%s1 + $0xc] sm:$0xf]
        %v229 = vld [vmem:[%s1 + $0x10] sm:$0xf]
        %v230 = vld [vmem:[%s1 + $0x14] sm:$0xf]
        %v231 = vld [vmem:[%s219] sm:$0xff]
        %v232 = vld [vmem:[%s219 + $0x8] sm:$0xff]
        %v235 = vunpack.c.l.b16 %v223
        %v236 = vunpack.c.l.b16 %v224
        %v237 = vpack.c.b16 %v236, %v235
        %v244 = vunpack.c.l.b16 %v225
        %v245 = vunpack.c.l.b16 %v226
        %v246 = vunpack.c.l.b16 %v227
        %v247 = vunpack.c.l.b16 %v228
        %v248 = vunpack.c.l.b16 %v229
        %v249 = vunpack.c.l.b16 %v230
        %v250 = vpack.c.b16 %v245, %v244
        %v251 = vpack.c.b16 %v247, %v246
        %v252 = vpack.c.b16 %v249, %v248
        %vm256 = vcmask 392192
        %v258 = vsel %vm256, %v237, 0
        %260 = vmatprep.subr.bf16.mxu0 0
        %261 = vmatpush1.bf16.msra.mxu0 %v250
        %262 = vmatprep.subr.bf16.mxu0 0
        %263 = vmatpush1.bf16.msra.mxu0 %v251
        %264 = vmatprep.subr.bf16.mxu0 0
        %265 = vmatpush1.bf16.msra.mxu0 %v252
        %266 = vmatprep.subr.bf16.mxu0 0
        %267 = vmatpush1.bf16.msra.mxu0 0
        %268 = vmatprep.subr.bf16.mxu0 0
        %269 = vmatpush1.bf16.msra.mxu0 0
        %270 = vmatprep.subr.bf16.mxu0 0
        %271 = vmatpush1.bf16.msra.mxu0 0
        %272 = vmatprep.subr.bf16.mxu0 0
        %273 = vmatpush1.bf16.msra.mxu0 0
        %274 = vmatprep.subr.bf16.mxu0 0
        %275 = vmatpush1.bf16.msra.mxu0 0
        %276 = vmatprep.subr.bf16.mxu0 0
        %277 = vmatpush1.bf16.msra.mxu0 0
        %278 = vmatprep.subr.bf16.mxu0 0
        %279 = vmatpush1.bf16.msra.mxu0 0
        %280 = vmatprep.subr.bf16.mxu0 0
        %281 = vmatpush1.bf16.msra.mxu0 0
        %282 = vmatprep.subr.bf16.mxu0 0
        %283 = vmatpush1.bf16.msra.mxu0 0
        %284 = vmatprep.subr.bf16.mxu0 0
        %285 = vmatpush1.bf16.msra.mxu0 0
        %286 = vmatprep.subr.bf16.mxu0 0
        %287 = vmatpush1.bf16.msra.mxu0 0
        %288 = vmatprep.subr.bf16.mxu0 0
        %289 = vmatpush1.bf16.msra.mxu0 0
        %290 = vmatprep.subr.bf16.mxu0 0
        %291 = vmatpush1.bf16.msra.mxu0 0
        %292 = vmatprep.mubr.bf16.mxu0 0
        %293 = vmatmul.mubr.bf16.gmra.mrb[0].mxu0 %v258
        %v294 = vpop.f32.mrb[0].mxu0
        %v295 = vadd.f32 %v231, %v294
        %v296 = vpop.f32.mrb[0].mxu0
        %v297 = vpop.f32.mrb[0].mxu0
        %v298 = vadd.f32 %v232, %v297
        %v299 = vpop.f32.mrb[0].mxu0
        %300 = vdwg.mxu0
        %301 = vst [vmem:[%s204] sm:$0xff] %v295
        %302 = vst [vmem:[%s204 + $0x8] sm:$0xff] %v298
        %s303 = sand.u32 %s114, 1
        %s304 = scalar_lea.sflag [#allocation3], %s303
        %s305 = sand.u32 %s114, 1
        %s306 = smul.addr %s305, 16
        %s307 = scalar_lea.vmem [#allocation2], %s306
        // Predicated region
        $region33: #{embeddings_forward.1} parent=31 // pred_check
          %p308 = pneg %p124
        $region34: #{embeddings_forward.1} parent=31 // pred_check_branch
          %310 = sbr.rel (%p308) target = $region36
        $region35: #{embeddings_forward.1} parent=31 // pred_region
          %s311 = smul.u32 2, %s22
          %s313 = ssub.s32 256, 256
          %314 = vsyncadd %s304, %s313
          %s315 = smul.addr %s21, 2
          %s316 = sadd.s32 %s311, %s315
          %s317 = smul.addr %s316, 128
          %s318 = scalar_lea.hbm %s3, %s317
          %s319 = sshll.u32 %s307, 4
          %s320 = int_to_ptr.vmem [resolvable:$true] %s319
          %325 = dma.vmem_to_hbm [thread:$0]  %s320, 256, %s318, %s304, 128, 128, 8
        $region36: #{embeddings_forward.1} parent=31 // pred_fallthru
          _
      $region32: #{embeddings_forward.1} parent=5 // pred_fallthru
        _
      %p326 = scmp.le.s32.totalorder 2, %s12
      // Predicated region
      $region37: #{embeddings_forward.1} parent=5 // pred_check
        %p327 = pneg %p326
      $region38: #{embeddings_forward.1} parent=5 // pred_check_branch
        %329 = sbr.rel (%p327) target = $region40
      $region39: #{embeddings_forward.1} parent=5 // pred_region
        %s330 = ssub.s32 %s12, 2
        // Predicated region
        $region41: #{embeddings_forward.1} parent=39 // pred_check
          %p331 = pneg %p130
        $region42: #{embeddings_forward.1} parent=39 // pred_check_branch
          %333 = sbr.rel (%p331) target = $region44
        $region43: #{embeddings_forward.1} parent=39 // pred_region
          %s334 = sand.u32 %s115, 1
          %s335 = scalar_lea.sflag [#allocation3], %s334
          %s336 = sand.u32 %s115, 1
          %s337 = smul.addr %s336, 16
          %s338 = scalar_lea.vmem [#allocation2], %s337
          %339 = dma.done %s335, 256
        $region44: #{embeddings_forward.1} parent=39 // pred_fallthru
          _
      $region40: #{embeddings_forward.1} parent=5 // pred_fallthru
        _
    $region6: #{embeddings_forward.1} parent=1 // loop_footer
      %s16 = sadd.s32 1, %s12
    $region7: #{embeddings_forward.1} parent=1 // loop_footer_branch
      %11 = sbr.rel target = $region3
    $region8: #{embeddings_forward.1} parent=1 // loop_exit
      _
    %340 = vsyncpa [#allocation3], 1
    %s341 = scalar_lea.sflag [#allocation3], 1
    %342 = vsyncpa %s341, 1

</llo_original>
